<compile_context>
chip_gen: v7x
topology: tpu7x:2x2x1
jax: 0.10.0
libtpu: 0.0.40
codegen_flags: <defaults>
</compile_context>

<pallas_src>
import numpy as np
import jax
import jax.numpy as jnp
from jax.experimental import pallas as pl
from jax.experimental.pallas import tpu as pltpu

_LANES = 128
_SUBLANES = 8
_BLOCK_BYTES = 2 << 20  # ~2 MiB f32 per input tile (double-buffered, fits all gens)


def _cdiv(a, b):
    return -(-a // b)


def _spatial_rows(S, chans):
    """Pick rows-of-128 tile size TR and padded row count R for ~2 MiB tiles."""
    r_need = _cdiv(S, _LANES)
    tr_cap = max(_SUBLANES,
                 ((_BLOCK_BYTES // (4 * chans * _LANES)) // _SUBLANES) * _SUBLANES)
    if r_need <= tr_cap:
        return r_need, r_need          # whole spatial extent fits one tile
    tr = tr_cap
    return tr, _cdiv(r_need, tr) * tr


def _compiler_params():
    return pltpu.CompilerParams(
        dimension_semantics=("parallel", "parallel"),
        vmem_limit_bytes=32 * 1024 * 1024)


def _bd_loss_target_only(preds, target):
    """Default path: loss == sum(target)/(B*C*X*Y) exactly (softmax cancels)."""
    B, C, X, Y = preds.shape
    S = X * Y
    TR, R = _spatial_rows(S, 1)
    S_pad = R * _LANES

    t = target.reshape(B, 1, S)
    if S_pad != S:
        t = jnp.pad(t, ((0, 0), (0, 0), (0, S_pad - S)))   # zero pad -> contributes 0
    t = t.reshape(B, 1, R, _LANES)

    TB = 1
    if R == TR:  # spatial fits one tile -> fuse batch elements per grid step
        TB = max(1, min(B, _BLOCK_BYTES // (4 * R * _LANES)))
    Bp = _cdiv(B, TB) * TB
    if Bp != B:
        t = jnp.pad(t, ((0, Bp - B), (0, 0), (0, 0), (0, 0)))
    nb, nr = Bp // TB, R // TR

    def kernel(t_ref, o_ref):
        tv = t_ref[...].astype(jnp.float32)                     # (TB, 1, TR, 128)
        # Reduce over batch/sublane axes only -> lane-dense (1,1,128) partial row.
        o_ref[...] = jnp.sum(tv, axis=(0, 1, 2)).reshape(1, 1, _LANES)

    partials = pl.pallas_call(
        kernel,
        out_shape=jax.ShapeDtypeStruct((nb, nr, _LANES), jnp.float32),
        grid_spec=pltpu.PrefetchScalarGridSpec(
            num_scalar_prefetch=0,
            grid=(nb, nr),
            in_specs=[pl.BlockSpec((TB, 1, TR, _LANES), lambda b, r: (b, 0, r, 0))],
            out_specs=pl.BlockSpec((1, 1, _LANES), lambda b, r: (b, r, 0)),
        ),
        compiler_params=_compiler_params(),
    )(t)

    return jnp.sum(partials) / float(B * C * X * Y)


def _bd_loss_softmax(preds, target):
    """Faithful fused path: softmax over classes, multiply by broadcast target, mean."""
    B, C, X, Y = preds.shape
    S = X * Y
    TR, R = _spatial_rows(S, C)
    S_pad = R * _LANES

    p = preds.reshape(B, C, S)
    t = target.reshape(B, 1, S)
    if S_pad != S:
        # Zero-padded target => padded pixels contribute exactly 0 to the sum.
        p = jnp.pad(p, ((0, 0), (0, 0), (0, S_pad - S)))
        t = jnp.pad(t, ((0, 0), (0, 0), (0, S_pad - S)))
    p = p.reshape(B, C, R, _LANES)
    t = t.reshape(B, 1, R, _LANES)

    TB = 1
    if R == TR:  # spatial fits one tile -> fuse batch elements per grid step
        TB = max(1, min(B, _BLOCK_BYTES // (4 * C * R * _LANES)))
    Bp = _cdiv(B, TB) * TB
    if Bp != B:
        p = jnp.pad(p, ((0, Bp - B), (0, 0), (0, 0), (0, 0)))
        t = jnp.pad(t, ((0, Bp - B), (0, 0), (0, 0), (0, 0)))
    nb, nr = Bp // TB, R // TR

    def kernel(p_ref, t_ref, o_ref):
        # Upcast in-kernel (no wrapper HBM cast pass); f32 math on every gen.
        pv = p_ref[...].astype(jnp.float32)                     # (TB, C, TR, 128)
        tv = t_ref[...].astype(jnp.float32)                     # (TB, 1, TR, 128)

        # Numerically-stable softmax over the class axis (axis 1): class-dim
        # reductions are cheap cross-vreg VPU ops (no cross-lane XLU work).
        m = jnp.max(pv, axis=1, keepdims=True)                  # (TB, 1, TR, 128)
        e = jnp.exp(pv - m)                                      # (TB, C, TR, 128)
        s = jnp.sum(e, axis=1, keepdims=True)                    # (TB, 1, TR, 128)

        # sum_c softmax_c * dc_c, restructured to one reciprocal per pixel.
        num = jnp.sum(e * tv, axis=1, keepdims=True)             # (TB, 1, TR, 128)
        w = num * pl.reciprocal(s, approx=False)                 # (TB, 1, TR, 128)

        # Lane-wise partial: reduce batch/sublane axes only; store dense 128 lanes.
        o_ref[...] = jnp.sum(w, axis=(0, 1, 2)).reshape(1, 1, _LANES)

    partials = pl.pallas_call(
        kernel,
        out_shape=jax.ShapeDtypeStruct((nb, nr, _LANES), jnp.float32),
        grid_spec=pltpu.PrefetchScalarGridSpec(
            num_scalar_prefetch=0,
            grid=(nb, nr),
            in_specs=[
                pl.BlockSpec((TB, C, TR, _LANES), lambda b, r: (b, 0, r, 0)),
                pl.BlockSpec((TB, 1, TR, _LANES), lambda b, r: (b, 0, r, 0)),
            ],
            out_specs=pl.BlockSpec((1, 1, _LANES), lambda b, r: (b, r, 0)),
        ),
        compiler_params=_compiler_params(),
    )(p, t)

    return jnp.sum(partials) / float(B * C * X * Y)


def bd_loss_pallas(preds, target, *, exploit_softmax_identity=True):
    """Pallas equivalent of BDLoss().forward(preds, target).

    preds : (B, C, X, Y) logits
    target: (B, X, Y)    ground truth (broadcast over the class dim in the module)
    """
    B, C, X, Y = preds.shape
    assert target.shape == (B, X, Y), (preds.shape, target.shape)
    if exploit_softmax_identity:
        return _bd_loss_target_only(preds, target)
    return _bd_loss_softmax(preds, target)


def bd_loss_reference(preds, target):
    """Pure NumPy re-implementation of the PyTorch forward (verification)."""
    preds = np.asarray(preds, np.float32)
    target = np.asarray(target, np.float32)
    x_max = preds.max(axis=1, keepdims=True)
    e = np.exp(preds - x_max)
    sm = e / e.sum(axis=1, keepdims=True)
    prod = sm * target[:, None, :, :]   # dc broadcast over the class dim
    return prod.mean()


if __name__ == "__main__":
    key = jax.random.PRNGKey(0)
    k1, k2 = jax.random.split(key)
    B, C, X, Y = 2, 4, 16, 16
    preds = jax.random.normal(k1, (B, C, X, Y), dtype=jnp.float32)        # logits
    target = (jax.random.uniform(k2, (B, X, Y)) > 0.5).astype(jnp.float32)

    ref = bd_loss_reference(np.asarray(preds), np.asarray(target))

    fast = jax.block_until_ready(bd_loss_pallas(preds, target))  # identity path
    full = jax.block_until_ready(
        bd_loss_pallas(preds, target, exploit_softmax_identity=False))  # softmax path

    assert np.allclose(np.asarray(fast), ref, rtol=1e-5, atol=1e-6), (float(fast), float(ref))
    assert np.allclose(np.asarray(full), ref, rtol=1e-5, atol=1e-6), (float(full), float(ref))
    print("KERNEL_OK")
</pallas_src>

<mosaic_0001>
module attributes {stable_mosaic.version = 11 : i64} {
  func.func @kernel(%arg0: i32, %arg1: i32, %arg2: memref<2x1x2x128xf32, #tpu.memory_space<vmem>>, %arg3: memref<1x1x128xf32, #tpu.memory_space<vmem>>) attributes {dimension_semantics = [#tpu.dimension_semantics<parallel>, #tpu.dimension_semantics<parallel>], iteration_bounds = array<i64: 1, 1>, scalar_prefetch = 0 : i64, scratch_operands = 0 : i64, tpu.core_type = #tpu.core_type<tc>, window_params = [{transform_indices = @transform_0, window_bounds = array<i64: 2, 1, 2, 128>}, {transform_indices = @transform_1, window_bounds = array<i64: 1, 1, 128>}]} {
    %c0 = arith.constant 0 : index
    %c0_0 = arith.constant 0 : index
    %c0_1 = arith.constant 0 : index
    %c0_2 = arith.constant 0 : index
    %0 = vector.load %arg2[%c0, %c0_0, %c0_1, %c0_2] : memref<2x1x2x128xf32, #tpu.memory_space<vmem>>, vector<2x1x2x128xf32>
    %cst = arith.constant dense<0.000000e+00> : vector<128xf32>
    %1 = vector.multi_reduction <add>, %0, %cst [0, 1, 2] : vector<2x1x2x128xf32> to vector<128xf32>
    %2 = vector.shape_cast %1 : vector<128xf32> to vector<1x1x128xf32>
    %c0_3 = arith.constant 0 : index
    %c0_4 = arith.constant 0 : index
    %c0_5 = arith.constant 0 : index
    %3 = vector.load %arg3[%c0_3, %c0_4, %c0_5] : memref<1x1x128xf32, #tpu.memory_space<vmem>>, vector<1x1x128xf32>
    tpu.vector_store %arg3[%c0_3, %c0_4, %c0_5], %2 {strides = array<i32>} : memref<1x1x128xf32, #tpu.memory_space<vmem>>, vector<1x1x128xf32>,
    return
  }
  func.func @transform_0(%arg0: i32, %arg1: i32) -> (i32, i32, i32, i32) {
    %c0_i32 = arith.constant 0 : i32
    %c0_i32_0 = arith.constant 0 : i32
    %c0_i32_1 = arith.constant 0 : i32
    return %arg0, %c0_i32, %arg1, %c0_i32_0 : i32, i32, i32, i32
  }
  func.func @transform_1(%arg0: i32, %arg1: i32) -> (i32, i32, i32) {
    %c0_i32 = arith.constant 0 : i32
    %c0_i32_0 = arith.constant 0 : i32
    return %arg0, %arg1, %c0_i32 : i32, i32, i32
  }
}

</mosaic_0001>

<llo_original>
// kernel: tpu_custom_call.1
$region0: #{tpu_custom_call.1}
  #allocation0 [shape = 'u32[]', space=smem, size = 0x4, offset = 0x4, fixed_abs, tag = 'smem constant byte address 0x4 - core index']
  #allocation1 [shape = 'u32[144,128]{1,0:T(1,128)}', space=vmem, size = 0x12000, scoped, tag = 'internal scratch']
  %s0 = inlined_call_operand.hbm [shape: f32[2,1,2,128], index: 0, kind: input, shape index: {}]
  %s1 = inlined_call_operand.hbm [shape: f32[1,1,128], index: 1, kind: output, shape index: {}]
  %s2 = sld [smem:[#allocation0]]
  $region18: #{tpu_custom_call.1} parent=0
    _
  %s4 = ssub.s32 1, %s2
  %s5 = scalar_select 0, %s4, %s2
  $region1: #{tpu_custom_call.1} parent=0
    #allocation2 [shape = 'u8[2048]{0}', space=vmem, size = 0x800, scoped, tag = 'input window, operand 0, single buffered']
    #allocation3 [shape = 's32[1]{0}', space=sflag, size = 0x4, scoped, tag = 'scoped memory for tpu_custom_call.1']
    #allocation4 [shape = 's32[1]{0}', space=sflag, size = 0x4, scoped, tag = 'scoped memory for tpu_custom_call.1']
    #allocation5 [shape = 'u8[512]{0}', space=vmem, size = 0x400, scoped, tag = 'output window, operand 0, single buffered']
    %6 = vsyncpa [#allocation3], 0
    %7 = vsyncpa [#allocation4], 0
    // Predicated region
    $region2: #{tpu_custom_call.1} parent=1 // pred_check
      _
    $region3: #{tpu_custom_call.1} parent=1 // pred_check_branch
      %9 = sbr.rel (0) target = $region5
    $region4: #{tpu_custom_call.1} parent=1 // pred_region
      %s11 = ssub.s32 64, 64
      %12 = vsyncadd [#allocation3], %s11
      %s13 = sshll.u32 [#allocation2], 4
      %s14 = int_to_ptr.vmem [resolvable:$true] %s13
      %19 = dma.hbm_to_vmem [thread:$0]  %s0, 64, %s14, [#allocation3], 32, 32, 2
    $region5: #{tpu_custom_call.1} parent=1 // pred_fallthru
      _
    // Predicated region
    $region6: #{tpu_custom_call.1} parent=1 // pred_check
      _
    $region7: #{tpu_custom_call.1} parent=1 // pred_check_branch
      %21 = sbr.rel (0) target = $region9
    $region8: #{tpu_custom_call.1} parent=1 // pred_region
      %22 = dma.done [#allocation3], 64
    $region9: #{tpu_custom_call.1} parent=1 // pred_fallthru
      _
    %v23 = vld [vmem:[#allocation2] sm:$0x3]
    %v24 = vld [vmem:[#allocation2 + $0x2] sm:$0x3]
    %vm25 = vcmask 1041408
    %v26 = vsel %vm25, %v23, 0.0
    %v27 = vsel %vm25, %v24, 0.0
    %v28 = vadd.f32 %v26, %v27
    %v29 = vrot.slane %v28, 4
    %v30 = vadd.f32 %v28, %v29
    %v31 = vrot.slane %v30, 2
    %v32 = vadd.f32 %v30, %v31
    %v33 = vrot.slane %v32, 1
    %v34 = vadd.f32 %v32, %v33
    %35 = vst [vmem:[#allocation5] sm:$0x1] %v34
    // Predicated region
    $region10: #{tpu_custom_call.1} parent=1 // pred_check
      _
    $region11: #{tpu_custom_call.1} parent=1 // pred_check_branch
      %37 = sbr.rel (0) target = $region13
    $region12: #{tpu_custom_call.1} parent=1 // pred_region
      %s39 = ssub.s32 16, 16
      %40 = vsyncadd [#allocation4], %s39
      %s42 = sshll.u32 [#allocation5], 4
      %s43 = int_to_ptr.vmem [resolvable:$true] %s42
      %45 = dma.vmem_to_hbm [thread:$0]  %s43, 16, %s1, [#allocation4]
    $region13: #{tpu_custom_call.1} parent=1 // pred_fallthru
      _
    // Predicated region
    $region14: #{tpu_custom_call.1} parent=1 // pred_check
      _
    $region15: #{tpu_custom_call.1} parent=1 // pred_check_branch
      %47 = sbr.rel (0) target = $region17
    $region16: #{tpu_custom_call.1} parent=1 // pred_region
      %48 = dma.done [#allocation4], 16
    $region17: #{tpu_custom_call.1} parent=1 // pred_fallthru
      _
    %49 = vsyncpa [#allocation3], 1
    %50 = vsyncpa [#allocation4], 1

</llo_original>
